<compile_context>
chip_gen: v7x
topology: tpu7x:2x2x1
jax: 0.10.0
libtpu: 0.0.40
codegen_flags: <defaults>
</compile_context>

<pallas_src>
import jax
import jax.numpy as jnp
from jax import lax
from jax.experimental import pallas as pl
from jax.experimental.pallas import tpu as pltpu


def _round_up(x: int, m: int) -> int:
    return ((x + m - 1) // m) * m


def _cdiv(a: int, b: int) -> int:
    return (a + b - 1) // b


def _pick_tile(dim: int, base: int, cap: int) -> int:
    """Largest t = base*d with d a divisor of ceil(dim/base) and t <= cap (t >= base)."""
    m = _cdiv(dim, base)
    best = 1
    d = 1
    while d * d <= m:
        if m % d == 0:
            for c in (d, m // d):
                if base * c <= cap and c > best:
                    best = c
        d += 1
    return base * best


def _adapter_v2_kernel_multi_k(x_ref, w_ref, bs_ref, o_ref, acc_ref):
    """Grid = (Mp/tm, Np/tn, Kp/tk); K (reduction) is the last, 'arbitrary' axis.

    x_ref  : (tm, tk)  activations tile
    w_ref  : (tn, tk)  weight tile in native [out, in] layout (no transpose)
    bs_ref : (2, tn)   row 0 = adapter_scale*(bias+adapter_bias), row 1 = adapter_scale
    """
    k = pl.program_id(2)

    # x @ W^T on the MXU: contract the last dim of x with the last dim of W
    # (lowers to plain vmatmul; no per-tile XLU transpose of W).
    prod = lax.dot_general(
        x_ref[...], w_ref[...],
        dimension_numbers=(((1,), (1,)), ((), ())),
        preferred_element_type=jnp.float32)

    @pl.when(k == 0)
    def _():
        acc_ref[...] = prod          # store first partial (no zero-init pass)

    @pl.when(k > 0)
    def _():
        acc_ref[...] += prod

    @pl.when(k == pl.num_programs(2) - 1)
    def _():
        bs = bs_ref[...]
        # scale * (acc + bias + adapter_bias) == scale * acc + prescaled_bias
        o_ref[...] = (bs[1:2, :] * acc_ref[...] + bs[0:1, :]).astype(o_ref.dtype)


def _adapter_v2_kernel_single_k(x_ref, w_ref, bs_ref, o_ref):
    """Single K step: no accumulator scratch, no pl.when phases."""
    prod = lax.dot_general(
        x_ref[...], w_ref[...],
        dimension_numbers=(((1,), (1,)), ((), ())),
        preferred_element_type=jnp.float32)
    bs = bs_ref[...]
    o_ref[...] = (bs[1:2, :] * prod + bs[0:1, :]).astype(o_ref.dtype)


def adapter_v2_linear(x, weight, bias, adapter_bias, adapter_scale,
                      *, tm=None, tn=None, tk=None, compute_dtype=None):
    """x: [..., in_features]; weight: [out_features, in_features] (PyTorch layout)."""
    orig_shape = x.shape
    K = orig_shape[-1]
    N = weight.shape[0]
    x2d = x.reshape(-1, K)
    M = x2d.shape[0]
    out_dtype = x.dtype

    if bias is None:
        bias = jnp.zeros((N,), dtype=jnp.float32)

    # Optional reduced-precision compute (accumulation stays f32 on the MXU).
    if compute_dtype is not None:
        x2d = x2d.astype(compute_dtype)
        weight = weight.astype(compute_dtype)

    # ---- Fold the epilogue vectors once in the wrapper (O(N) glue). ----
    scale_f32 = adapter_scale.astype(jnp.float32)
    eff_bias = scale_f32 * (bias.astype(jnp.float32)
                            + adapter_bias.astype(jnp.float32))
    bs = jnp.stack([eff_bias, scale_f32], axis=0)          # (2, N): [bias; scale]

    # ---- Shape-adaptive, generation-aware tile selection. ----
    itemsize = jnp.dtype(x2d.dtype).itemsize
    pack = max(8, 32 // itemsize)                          # f32->8, bf16->16, int8->32
    Mq = _round_up(M, pack)
    Np0 = _round_up(N, 128)
    Kp0 = _round_up(K, 128)

    try:
        kind = jax.devices()[0].device_kind.lower()
    except Exception:  # pragma: no cover
        kind = ""

    if Mq <= 256:
        # Decode regime: W-stream bound -> large weight tiles amortize per-step overhead.
        tm_cap, tn_cap, tk_cap = 256, 512, 2048
    elif "v6" in kind:
        # v6e: roofline knee ~656 FLOP/B -> 1024x1024 output tiles (VMEM is 128 MiB).
        tm_cap, tn_cap, tk_cap = 1024, 1024, 512
    else:
        # v5e / v7x: 512x512 is already at/near the knee; keep working set modest.
        tm_cap, tn_cap, tk_cap = 512, 512, 1024

    if tm is None:
        tm = _pick_tile(Mq, pack, tm_cap)
        if tm * 2 < min(tm_cap, Mq):       # pathological factorization -> pad M instead
            tm = min(tm_cap, Mq)
    if tn is None:
        tn = _pick_tile(Np0, 128, tn_cap)  # divides Np0 -> no weight padding in N
    if tk is None:
        tk = _pick_tile(Kp0, 128, tk_cap)  # divides Kp0 -> no weight padding in K

    Mp = _round_up(Mq, tm)
    Np = _round_up(Np0, tn)
    Kp = _round_up(Kp0, tk)

    # v7x has 2 TensorCores: make sure at least one "parallel" axis has >= 2 blocks.
    if Mp // tm == 1 and Np // tn == 1 and Np >= 256:
        tn = _pick_tile(Np, 128, Np // 2)

    # ---- Zero-pad only when needed (no-op for 128-aligned N/K, the common case). ----
    if (Mp, Kp) != (M, K):
        x2d = jnp.pad(x2d, ((0, Mp - M), (0, Kp - K)))     # cheap: activations only
    w = weight
    if (Np, Kp) != (N, K):
        w = jnp.pad(w, ((0, Np - N), (0, Kp - K)))         # rare: ragged N/K only
    if Np != N:
        bs = jnp.pad(bs, ((0, 0), (0, Np - N)))

    k_steps = Kp // tk
    grid_m, grid_n = Mp // tm, Np // tn

    # ---- VMEM budget: double-buffered streams (+ f32 accumulator when multi-K). ----
    vmem_bytes = (2 * (tm * tk + tn * tk) * itemsize        # x / W tiles
                  + 2 * tm * tn * jnp.dtype(out_dtype).itemsize
                  + (tm * tn * 4 if k_steps > 1 else 0)     # accumulator scratch
                  + 2 * 2 * tn * 4)                         # folded bias/scale rows
    vmem_limit = int(min(max(vmem_bytes + (8 << 20), 32 << 20), 48 << 20))

    if k_steps == 1:
        kernel = _adapter_v2_kernel_single_k
        grid_spec = pltpu.PrefetchScalarGridSpec(
            num_scalar_prefetch=0,
            grid=(grid_m, grid_n),
            in_specs=[
                pl.BlockSpec((tm, tk), lambda i, j: (i, 0)),   # x tile
                pl.BlockSpec((tn, tk), lambda i, j: (j, 0)),   # W tile [out, in]
                pl.BlockSpec((2, tn), lambda i, j: (0, j)),    # [bias; scale]
            ],
            out_specs=pl.BlockSpec((tm, tn), lambda i, j: (i, j)),
            scratch_shapes=[],
        )
        dims = ("parallel", "parallel")
    else:
        kernel = _adapter_v2_kernel_multi_k
        grid_spec = pltpu.PrefetchScalarGridSpec(
            num_scalar_prefetch=0,
            grid=(grid_m, grid_n, k_steps),
            in_specs=[
                pl.BlockSpec((tm, tk), lambda i, j, k: (i, k)),   # x tile
                pl.BlockSpec((tn, tk), lambda i, j, k: (j, k)),   # W tile [out, in]
                pl.BlockSpec((2, tn), lambda i, j, k: (0, j)),    # [bias; scale]
            ],
            out_specs=pl.BlockSpec((tm, tn), lambda i, j, k: (i, j)),
            scratch_shapes=[pltpu.VMEM((tm, tn), jnp.float32)],
        )
        dims = ("parallel", "parallel", "arbitrary")

    out2d = pl.pallas_call(
        kernel,
        out_shape=jax.ShapeDtypeStruct((Mp, Np), out_dtype),
        grid_spec=grid_spec,
        compiler_params=pltpu.CompilerParams(
            dimension_semantics=dims,
            vmem_limit_bytes=vmem_limit),
    )(x2d, w, bs)

    if (Mp, Np) != (M, N):
        out2d = out2d[:M, :N]
    return out2d.reshape(*orig_shape[:-1], N)


if __name__ == "__main__":
    # Small shapes consistent with the module: batch=2, seq=8, hidden sizes.
    B, S = 2, 8
    in_features, out_features = 256, 128

    key = jax.random.PRNGKey(0)
    kx, kw, kb = jax.random.split(key, 3)

    x = jax.random.normal(kx, (B, S, in_features), dtype=jnp.float32)

    # Deterministic parameter init (shapes from AdapterV2Linear.__init__):
    #   linear.weight: [out, in], linear.bias: [out]
    #   adapter_bias = zeros(out), adapter_scale = ones(out)
    bound = 1.0 / (in_features ** 0.5)
    weight = jax.random.uniform(kw, (out_features, in_features),
                                minval=-bound, maxval=bound, dtype=jnp.float32)
    lin_bias = jax.random.uniform(kb, (out_features,),
                                  minval=-bound, maxval=bound, dtype=jnp.float32)
    adapter_bias = jnp.zeros((out_features,), dtype=jnp.float32)
    adapter_scale = jnp.ones((out_features,), dtype=jnp.float32)

    y_ref = adapter_scale * (x @ weight.T + lin_bias + adapter_bias)

    # 1) Default (single-K-step fast path, no padding anywhere).
    y = jax.block_until_ready(
        adapter_v2_linear(x, weight, lin_bias, adapter_bias, adapter_scale))
    assert y.shape == (B, S, out_features)
    assert jnp.allclose(y, y_ref, atol=1e-4, rtol=1e-4), "mismatch vs reference"

    # 2) Multi-K-step accumulator path (force tk=128 -> 2 reduction steps).
    y_mk = jax.block_until_ready(
        adapter_v2_linear(x, weight, lin_bias, adapter_bias, adapter_scale, tk=128))
    assert jnp.allclose(y_mk, y_ref, atol=1e-4, rtol=1e-4), "mismatch (multi-K path)"

    # 3) Padded-M path with a non-pack-aligned leading shape.
    x2 = jax.random.normal(kx, (3, 5, in_features), dtype=jnp.float32)
    y2 = jax.block_until_ready(
        adapter_v2_linear(x2, weight, lin_bias, adapter_bias, adapter_scale))
    y2_ref = adapter_scale * (x2 @ weight.T + lin_bias + adapter_bias)
    assert jnp.allclose(y2, y2_ref, atol=1e-4, rtol=1e-4), "mismatch (padded path)"

    print("KERNEL_OK")
</pallas_src>

<mosaic_0001>
module attributes {stable_mosaic.version = 11 : i64} {
  func.func @_adapter_v2_kernel_single_k(%arg0: i32, %arg1: i32, %arg2: memref<16x256xf32, #tpu.memory_space<vmem>>, %arg3: memref<128x256xf32, #tpu.memory_space<vmem>>, %arg4: memref<2x128xf32, #tpu.memory_space<vmem>>, %arg5: memref<16x128xf32, #tpu.memory_space<vmem>>) attributes {dimension_semantics = [#tpu.dimension_semantics<parallel>, #tpu.dimension_semantics<parallel>], iteration_bounds = array<i64: 1, 1>, scalar_prefetch = 0 : i64, scratch_operands = 0 : i64, tpu.core_type = #tpu.core_type<tc>, window_params = [{transform_indices = @transform_0, window_bounds = array<i64: 16, 256>}, {transform_indices = @transform_1, window_bounds = array<i64: 128, 256>}, {transform_indices = @transform_2, window_bounds = array<i64: 2, 128>}, {transform_indices = @transform_3, window_bounds = array<i64: 16, 128>}]} {
    %c0 = arith.constant 0 : index
    %c0_0 = arith.constant 0 : index
    %0 = vector.load %arg2[%c0, %c0_0] : memref<16x256xf32, #tpu.memory_space<vmem>>, vector<16x256xf32>
    %c0_1 = arith.constant 0 : index
    %c0_2 = arith.constant 0 : index
    %1 = vector.load %arg3[%c0_1, %c0_2] : memref<128x256xf32, #tpu.memory_space<vmem>>, vector<128x256xf32>
    %cst = arith.constant dense<0.000000e+00> : vector<16x128xf32>
    %2 = tpu.matmul %0, %1, %cst {dimension_numbers = #tpu.dot_dimension_numbers<[1], [1], [0], [0], [0, 0, 1, 0], [], []>} : vector<16x256xf32>, vector<128x256xf32>, vector<16x128xf32> -> vector<16x128xf32>
    %c0_3 = arith.constant 0 : index
    %c0_4 = arith.constant 0 : index
    %3 = vector.load %arg4[%c0_3, %c0_4] : memref<2x128xf32, #tpu.memory_space<vmem>>, vector<2x128xf32>
    %4 = vector.extract_strided_slice %3 {offsets = [1, 0], sizes = [1, 128], strides = [1, 1]} : vector<2x128xf32> to vector<1x128xf32>
    %5 = vector.broadcast %4 : vector<1x128xf32> to vector<16x128xf32>
    %6 = arith.mulf %5, %2 : vector<16x128xf32>
    %7 = vector.extract_strided_slice %3 {offsets = [0, 0], sizes = [1, 128], strides = [1, 1]} : vector<2x128xf32> to vector<1x128xf32>
    %8 = vector.broadcast %7 : vector<1x128xf32> to vector<16x128xf32>
    %9 = arith.addf %6, %8 : vector<16x128xf32>
    %c0_5 = arith.constant 0 : index
    %c0_6 = arith.constant 0 : index
    %10 = vector.load %arg5[%c0_5, %c0_6] : memref<16x128xf32, #tpu.memory_space<vmem>>, vector<16x128xf32>
    tpu.vector_store %arg5[%c0_5, %c0_6], %9 {strides = array<i32>} : memref<16x128xf32, #tpu.memory_space<vmem>>, vector<16x128xf32>,
    return
  }
  func.func @transform_0(%arg0: i32, %arg1: i32) -> (i32, i32) {
    %c0_i32 = arith.constant 0 : i32
    %c0_i32_0 = arith.constant 0 : i32
    return %arg0, %c0_i32 : i32, i32
  }
  func.func @transform_1(%arg0: i32, %arg1: i32) -> (i32, i32) {
    %c0_i32 = arith.constant 0 : i32
    %c0_i32_0 = arith.constant 0 : i32
    return %arg1, %c0_i32 : i32, i32
  }
  func.func @transform_2(%arg0: i32, %arg1: i32) -> (i32, i32) {
    %c0_i32 = arith.constant 0 : i32
    %c0_i32_0 = arith.constant 0 : i32
    return %c0_i32, %arg1 : i32, i32
  }
  func.func @transform_3(%arg0: i32, %arg1: i32) -> (i32, i32) {
    %c0_i32 = arith.constant 0 : i32
    return %arg0, %arg1 : i32, i32
  }
}

</mosaic_0001>

<llo_original>
// kernel: tpu_custom_call.1
$region0: #{tpu_custom_call.1}
  #allocation0 [shape = 'u32[]', space=smem, size = 0x4, offset = 0x4, fixed_abs, tag = 'smem constant byte address 0x4 - core index']
  #allocation1 [shape = 'u32[144,128]{1,0:T(1,128)}', space=vmem, size = 0x12000, scoped, tag = 'internal scratch']
  %s0 = inlined_call_operand.hbm [shape: f32[16,256], index: 0, kind: input, shape index: {}]
  %s1 = inlined_call_operand.hbm [shape: f32[128,256], index: 1, kind: input, shape index: {}]
  %s2 = inlined_call_operand.vmem [shape: f32[2,128], index: 2, kind: input, shape index: {}]
  %s3 = inlined_call_operand.hbm [shape: f32[16,128], index: 3, kind: output, shape index: {}]
  %s4 = sld [smem:[#allocation0]]
  $region30: #{tpu_custom_call.1} parent=0
    _
  %s6 = ssub.s32 1, %s4
  %s7 = scalar_select 0, %s6, %s4
  $region1: #{tpu_custom_call.1} parent=0
    #allocation2 [shape = 'u8[16384]{0}', space=vmem, size = 0x4000, scoped, tag = 'input window, operand 0, single buffered']
    #allocation3 [shape = 's32[1]{0}', space=sflag, size = 0x4, scoped, tag = 'scoped memory for tpu_custom_call.1']
    #allocation4 [shape = 's32[1]{0}', space=sflag, size = 0x4, scoped, tag = 'scoped memory for tpu_custom_call.1']
    #allocation5 [shape = 'u8[131072]{0}', space=vmem, size = 0x20000, scoped, tag = 'input window, operand 1, single buffered']
    #allocation6 [shape = 's32[1]{0}', space=sflag, size = 0x4, scoped, tag = 'scoped memory for tpu_custom_call.1']
    #allocation7 [shape = 'u8[8192]{0}', space=vmem, size = 0x2000, scoped, tag = 'output window, operand 0, single buffered']
    %8 = vsyncpa [#allocation3], 0
    %9 = vsyncpa [#allocation6], 0
    %10 = vsyncpa [#allocation4], 0
    // Predicated region
    $region2: #{tpu_custom_call.1} parent=1 // pred_check
      _
    $region3: #{tpu_custom_call.1} parent=1 // pred_check_branch
      %12 = sbr.rel (0) target = $region5
    $region4: #{tpu_custom_call.1} parent=1 // pred_region
      %s14 = ssub.s32 512, 512
      %15 = vsyncadd [#allocation3], %s14
      %s16 = sshll.u32 [#allocation2], 4
      %s17 = int_to_ptr.vmem [resolvable:$true] %s16
      %22 = dma.hbm_to_vmem [thread:$0]  %s0, 512, %s17, [#allocation3], 256, 256, 16
    $region5: #{tpu_custom_call.1} parent=1 // pred_fallthru
      _
    // Predicated region
    $region6: #{tpu_custom_call.1} parent=1 // pred_check
      _
    $region7: #{tpu_custom_call.1} parent=1 // pred_check_branch
      %24 = sbr.rel (0) target = $region9
    $region8: #{tpu_custom_call.1} parent=1 // pred_region
      %s26 = ssub.s32 4096, 4096
      %27 = vsyncadd [#allocation6], %s26
      %s28 = sshll.u32 [#allocation5], 4
      %s29 = int_to_ptr.vmem [resolvable:$true] %s28
      %34 = dma.hbm_to_vmem [thread:$0]  %s1, 4096, %s29, [#allocation6], 256, 256, 16
    $region9: #{tpu_custom_call.1} parent=1 // pred_fallthru
      _
    // Predicated region
    $region10: #{tpu_custom_call.1} parent=1 // pred_check
      _
    $region11: #{tpu_custom_call.1} parent=1 // pred_check_branch
      %36 = sbr.rel (0) target = $region13
    $region12: #{tpu_custom_call.1} parent=1 // pred_region
      _
    $region13: #{tpu_custom_call.1} parent=1 // pred_fallthru
      _
    // Predicated region
    $region14: #{tpu_custom_call.1} parent=1 // pred_check
      _
    $region15: #{tpu_custom_call.1} parent=1 // pred_check_branch
      %38 = sbr.rel (0) target = $region17
    $region16: #{tpu_custom_call.1} parent=1 // pred_region
      %39 = dma.done [#allocation3], 512
    $region17: #{tpu_custom_call.1} parent=1 // pred_fallthru
      _
    // Predicated region
    $region18: #{tpu_custom_call.1} parent=1 // pred_check
      _
    $region19: #{tpu_custom_call.1} parent=1 // pred_check_branch
      %41 = sbr.rel (0) target = $region21
    $region20: #{tpu_custom_call.1} parent=1 // pred_region
      %42 = dma.done [#allocation6], 4096
    $region21: #{tpu_custom_call.1} parent=1 // pred_fallthru
      _
    %v43 = vld [vmem:[#allocation2] sm:$0xff]
    %v44 = vld [vmem:[#allocation2 + $0x8] sm:$0xff]
    %v45 = vld [vmem:[#allocation2 + $0x10] sm:$0xff]
    %v46 = vld [vmem:[#allocation2 + $0x18] sm:$0xff]
    %v47 = vld [vmem:[#allocation5] sm:$0xff]
    %v48 = vld [vmem:[#allocation5 + $0x8] sm:$0xff]
    %v49 = vld [vmem:[#allocation5 + $0x10] sm:$0xff]
    %v50 = vld [vmem:[#allocation5 + $0x18] sm:$0xff]
    %v51 = vld [vmem:[#allocation5 + $0x20] sm:$0xff]
    %v52 = vld [vmem:[#allocation5 + $0x28] sm:$0xff]
    %v53 = vld [vmem:[#allocation5 + $0x30] sm:$0xff]
    %v54 = vld [vmem:[#allocation5 + $0x38] sm:$0xff]
    %v55 = vld [vmem:[#allocation5 + $0x40] sm:$0xff]
    %v56 = vld [vmem:[#allocation5 + $0x48] sm:$0xff]
    %v57 = vld [vmem:[#allocation5 + $0x50] sm:$0xff]
    %v58 = vld [vmem:[#allocation5 + $0x58] sm:$0xff]
    %v59 = vld [vmem:[#allocation5 + $0x60] sm:$0xff]
    %v60 = vld [vmem:[#allocation5 + $0x68] sm:$0xff]
    %v61 = vld [vmem:[#allocation5 + $0x70] sm:$0xff]
    %v62 = vld [vmem:[#allocation5 + $0x78] sm:$0xff]
    %v63 = vld [vmem:[#allocation5 + $0x80] sm:$0xff]
    %v64 = vld [vmem:[#allocation5 + $0x88] sm:$0xff]
    %v65 = vld [vmem:[#allocation5 + $0x90] sm:$0xff]
    %v66 = vld [vmem:[#allocation5 + $0x98] sm:$0xff]
    %v67 = vld [vmem:[#allocation5 + $0xa0] sm:$0xff]
    %v68 = vld [vmem:[#allocation5 + $0xa8] sm:$0xff]
    %v69 = vld [vmem:[#allocation5 + $0xb0] sm:$0xff]
    %v70 = vld [vmem:[#allocation5 + $0xb8] sm:$0xff]
    %v71 = vld [vmem:[#allocation5 + $0xc0] sm:$0xff]
    %v72 = vld [vmem:[#allocation5 + $0xc8] sm:$0xff]
    %v73 = vld [vmem:[#allocation5 + $0xd0] sm:$0xff]
    %v74 = vld [vmem:[#allocation5 + $0xd8] sm:$0xff]
    %v75 = vld [vmem:[#allocation5 + $0xe0] sm:$0xff]
    %v76 = vld [vmem:[#allocation5 + $0xe8] sm:$0xff]
    %v77 = vld [vmem:[#allocation5 + $0xf0] sm:$0xff]
    %v78 = vld [vmem:[#allocation5 + $0xf8] sm:$0xff]
    %79 = vmatprep.subr.mxu0 %v48
    %80 = vmatpush1.xpose.msra.mxu0 %v47
    %81 = vmatprep.subr.mxu0 %v50
    %82 = vmatpush1.xpose.msra.mxu0 %v49
    %83 = vmatprep.subr.mxu0 %v52
    %84 = vmatpush1.xpose.msra.mxu0 %v51
    %85 = vmatprep.subr.mxu0 %v54
    %86 = vmatpush1.xpose.msra.mxu0 %v53
    %87 = vmatprep.subr.mxu0 %v56
    %88 = vmatpush1.xpose.msra.mxu0 %v55
    %89 = vmatprep.subr.mxu0 %v58
    %90 = vmatpush1.xpose.msra.mxu0 %v57
    %91 = vmatprep.subr.mxu0 %v60
    %92 = vmatpush1.xpose.msra.mxu0 %v59
    %93 = vmatprep.subr.mxu0 %v62
    %94 = vmatpush1.xpose.msra.mxu0 %v61
    %95 = vmatprep.subr.mxu0 %v64
    %96 = vmatpush1.xpose.msra.mxu0 %v63
    %97 = vmatprep.subr.mxu0 %v66
    %98 = vmatpush1.xpose.msra.mxu0 %v65
    %99 = vmatprep.subr.mxu0 %v68
    %100 = vmatpush1.xpose.msra.mxu0 %v67
    %101 = vmatprep.subr.mxu0 %v70
    %102 = vmatpush1.xpose.msra.mxu0 %v69
    %103 = vmatprep.subr.mxu0 %v72
    %104 = vmatpush1.xpose.msra.mxu0 %v71
    %105 = vmatprep.subr.mxu0 %v74
    %106 = vmatpush1.xpose.msra.mxu0 %v73
    %107 = vmatprep.subr.mxu0 %v76
    %108 = vmatpush1.xpose.msra.mxu0 %v75
    %109 = vmatprep.subr.mxu0 %v78
    %110 = vmatpush1.xpose.msra.mxu0 %v77
    %111 = vmatprep.subr.mxu0 0.0
    %112 = vmatpush1.xpose.msra.mxu0 0.0
    %113 = vmatprep.subr.mxu0 0.0
    %114 = vmatpush1.xpose.msra.mxu0 0.0
    %115 = vmatprep.subr.mxu0 0.0
    %116 = vmatpush1.xpose.msra.mxu0 0.0
    %117 = vmatprep.subr.mxu0 0.0
    %118 = vmatpush1.xpose.msra.mxu0 0.0
    %119 = vmatprep.subr.mxu0 0.0
    %120 = vmatpush1.xpose.msra.mxu0 0.0
    %121 = vmatprep.subr.mxu0 0.0
    %122 = vmatpush1.xpose.msra.mxu0 0.0
    %123 = vmatprep.subr.mxu0 0.0
    %124 = vmatpush1.xpose.msra.mxu0 0.0
    %125 = vmatprep.subr.mxu0 0.0
    %126 = vmatpush1.xpose.msra.mxu0 0.0
    %127 = vmatprep.subr.mxu0 0.0
    %128 = vmatpush1.xpose.msra.mxu0 0.0
    %129 = vmatprep.subr.mxu0 0.0
    %130 = vmatpush1.xpose.msra.mxu0 0.0
    %131 = vmatprep.subr.mxu0 0.0
    %132 = vmatpush1.xpose.msra.mxu0 0.0
    %133 = vmatprep.subr.mxu0 0.0
    %134 = vmatpush1.xpose.msra.mxu0 0.0
    %135 = vmatprep.subr.mxu0 0.0
    %136 = vmatpush1.xpose.msra.mxu0 0.0
    %137 = vmatprep.subr.mxu0 0.0
    %138 = vmatpush1.xpose.msra.mxu0 0.0
    %139 = vmatprep.subr.mxu0 0.0
    %140 = vmatpush1.xpose.msra.mxu0 0.0
    %141 = vmatprep.subr.mxu0 0.0
    %142 = vmatpush1.xpose.msra.mxu0 0.0
    %143 = vmatprep.mubr.f32.mxu0 %v44
    %144 = vmatmul.mubr.f32.gmra.mrb[0].mxu0 %v43
    %v145 = vpop.f32.mrb[0].mxu0
    %v146 = vadd.f32 0.0, %v145
    %v147 = vpop.f32.mrb[0].mxu0
    %148 = vmatprep.mubr.f32.mxu0 %v46
    %149 = vmatmul.mubr.f32.gmra.mrb[0].mxu0 %v45
    %v150 = vpop.f32.mrb[0].mxu0
    %v151 = vadd.f32 0.0, %v150
    %v152 = vpop.f32.mrb[0].mxu0
    %153 = vdwg.mxu0
    %v154 = vld [vmem:[%s2] sm:$0x3]
    %v155 = vlaneseq
    %v156 = vshrl.u32 %v155, 7
    %v157 = vsub.s32 1, %v156
    %v158 = vrot.slane %v154, %v157
    %v159 = vmul.f32 %v158, %v146
    %v160 = vmul.f32 %v158, %v151
    %v161 = vlaneseq
    %v162 = vshrl.u32 %v161, 7
    %v163 = vsub.s32 0, %v162
    %v164 = vrot.slane %v154, %v163
    %v165 = vadd.f32 %v159, %v164
    %v166 = vadd.f32 %v160, %v164
    %167 = vst [vmem:[#allocation7] sm:$0xff] %v165
    %168 = vst [vmem:[#allocation7 + $0x8] sm:$0xff] %v166
    // Predicated region
    $region22: #{tpu_custom_call.1} parent=1 // pred_check
      _
    $region23: #{tpu_custom_call.1} parent=1 // pred_check_branch
      %170 = sbr.rel (0) target = $region25
    $region24: #{tpu_custom_call.1} parent=1 // pred_region
      %s172 = ssub.s32 256, 256
      %173 = vsyncadd [#allocation4], %s172
      %s174 = sshll.u32 [#allocation7], 4
      %s175 = int_to_ptr.vmem [resolvable:$true] %s174
      %180 = dma.vmem_to_hbm [thread:$0]  %s175, 256, %s3, [#allocation4], 128, 128, 8
    $region25: #{tpu_custom_call.1} parent=1 // pred_fallthru
      _
    // Predicated region
    $region26: #{tpu_custom_call.1} parent=1 // pred_check
      _
    $region27: #{tpu_custom_call.1} parent=1 // pred_check_branch
      %182 = sbr.rel (0) target = $region29
    $region28: #{tpu_custom_call.1} parent=1 // pred_region
      %183 = dma.done [#allocation4], 256
    $region29: #{tpu_custom_call.1} parent=1 // pred_fallthru
      _
    %184 = vsyncpa [#allocation3], 1
    %185 = vsyncpa [#allocation6], 1
    %186 = vsyncpa [#allocation4], 1

</llo_original>
